<compile_context>
chip_gen: v5e
topology: v5e:2x2
jax: 0.10.0
libtpu: 0.0.40
codegen_flags: <defaults>
</compile_context>

<pallas_src>
import jax
import jax.numpy as jnp
from jax import lax
from jax.experimental import pallas as pl
from jax.experimental.pallas import tpu as pltpu


def _round_up(n, m):
    return ((n + m - 1) // m) * m


def _mlp_kernel(x_ref, w1_ref, b1_ref, w2_ref, b2_ref, w3_ref, b3_ref, o_ref):
    cdt = w1_ref.dtype  # MXU operand dtype (f32 or bf16); accumulation stays f32.

    # In-kernel cast of the x tile: a VPU pack hidden under the tile DMA (avoids a
    # separate wrapper-side XLA astype pass over x in HBM). No-op when dtypes match.
    x = x_ref[...].astype(cdt)

    # fc1 + ReLU  (bias add + ReLU on the VPU in f32).
    h1 = jnp.dot(x, w1_ref[...], preferred_element_type=jnp.float32)
    h1 = jnp.maximum(h1 + b1_ref[...], 0.0).astype(cdt)

    # fc2 + ReLU.
    h2 = jnp.dot(h1, w2_ref[...], preferred_element_type=jnp.float32)
    h2 = jnp.maximum(h2 + b2_ref[...], 0.0).astype(cdt)

    # fc3 (single output unit): contract over hidden with the batch dim landing on
    # lanes:  (1, H) . (tile_b, H)^T -> (1, tile_b)   => lane-dense output row.
    # This is the same NT contraction pattern as flash-attention QK^T, which lowers
    # to the MXU without an explicit relayout of h2.
    out = lax.dot_general(
        w3_ref[...], h2,
        dimension_numbers=(((1,), (1,)), ((), ())),
        preferred_element_type=jnp.float32,
    )
    o_ref[...] = (out + b3_ref[0, 0]).astype(o_ref.dtype)


def _choose_tile_b(batch, input_dim, x_itemsize):
    """Pick the batch tile: big enough to amortize the ~0.35 us per-grid-step overhead,
    >= 2 tiles when possible (v7x megacore), and small enough that the double-buffered
    x stream stays well inside v5e's 16 MiB default scoped VMEM."""
    if batch <= 256:
        return batch                                   # single block == full array dims
    cap = 2048                                         # mem-bound regime: go big
    lane_bytes = _round_up(input_dim, 128) * x_itemsize
    by_vmem = (8 * 1024 * 1024) // (2 * lane_bytes)    # budget ~8 MiB for the 2 x buffers
    cap = max(256, min(cap, (by_vmem // 256) * 256))
    two_way = _round_up(-(-batch // 2), 256)           # ceil(B/2) -> >= 2 tiles on v7x
    return min(cap, two_way)


def _estimate_vmem_bytes(tile_b, input_dim, hidden_dim, x_itemsize, w_itemsize):
    """Rough per-step VMEM footprint (inputs double-buffered, incl. residents)."""
    li = _round_up(input_dim, 128)
    lh = _round_up(hidden_dim, 128)
    x_buf = 2 * _round_up(tile_b, 8) * li * x_itemsize
    w1 = 2 * _round_up(input_dim, 8) * lh * w_itemsize
    w2 = 2 * _round_up(hidden_dim, 8) * lh * w_itemsize
    small = 2 * 3 * 8 * lh * 4                         # b1, b2, w3 row
    out = 2 * 8 * _round_up(tile_b, 128) * 4
    inter = 2 * _round_up(tile_b, 8) * lh * 4          # h1 / h2 live values + spill
    return x_buf + w1 + w2 + small + out + inter


def accuracy_predictor_forward(x, params, *, tile_b=None):
    """x: [B, input_dim].  params: w1/w2/w3 stored as [in, out] (transposed vs PyTorch),
    b1/b2 as [1, out], b3 as [1, 1].  Returns [B, 1] float32."""
    w1, b1 = params["w1"], params["b1"]
    w2, b2 = params["w2"], params["b2"]
    w3, b3 = params["w3"], params["b3"]
    input_dim, hidden_dim = w1.shape
    B = x.shape[0]

    cdt = w1.dtype                                     # compute dtype follows the weights
    w3_row = w3.reshape(1, hidden_dim).astype(cdt)
    b1 = b1.reshape(1, hidden_dim).astype(jnp.float32)
    b2 = b2.reshape(1, hidden_dim).astype(jnp.float32)
    b3_s = b3.reshape(1, 1).astype(jnp.float32)

    if tile_b is None:
        tile_b = _choose_tile_b(B, input_dim, x.dtype.itemsize)
    tile_b = min(tile_b, B)
    if tile_b != B:
        # lane-dense out block needs a 128 multiple; x block rows need an 8 multiple.
        assert tile_b % 128 == 0, "tile_b must be a multiple of 128 (or the full batch)"

    num_tiles = pl.cdiv(B, tile_b)                     # partial final block is fine

    est = _estimate_vmem_bytes(tile_b, input_dim, hidden_dim,
                               x.dtype.itemsize, jnp.dtype(cdt).itemsize)
    vmem_limit = None
    if est > 12 * 1024 * 1024:                         # only override when near v5e default
        vmem_limit = int(min(est * 5 // 4, 120 * 1024 * 1024))

    resident = lambda i: (0, 0)                        # weights/biases: DMA'd once
    out = pl.pallas_call(
        _mlp_kernel,
        out_shape=jax.ShapeDtypeStruct((1, B), jnp.float32),
        grid_spec=pltpu.PrefetchScalarGridSpec(
            num_scalar_prefetch=0,
            grid=(num_tiles,),
            in_specs=[
                pl.BlockSpec((tile_b, input_dim), lambda i: (i, 0)),   # x tile (pipelined)
                pl.BlockSpec((input_dim, hidden_dim), resident),       # w1 (resident)
                pl.BlockSpec((1, hidden_dim), resident),               # b1 (resident)
                pl.BlockSpec((hidden_dim, hidden_dim), resident),      # w2 (resident)
                pl.BlockSpec((1, hidden_dim), resident),               # b2 (resident)
                pl.BlockSpec((1, hidden_dim), resident),               # w3 row (resident)
                pl.BlockSpec(memory_space=pltpu.MemorySpace.SMEM),     # b3 scalar (SMEM)
            ],
            out_specs=pl.BlockSpec((1, tile_b), lambda i: (0, i)),     # lane-dense row
        ),
        compiler_params=pltpu.CompilerParams(
            dimension_semantics=("parallel",),   # shard batch tiles across TCs (v7x)
            vmem_limit_bytes=vmem_limit,
        ),
    )(x, w1, b1, w2, b2, w3_row, b3_s)

    return out.reshape(B, 1)                           # free row-major view


def init_params(key, input_dim, hidden_dim, dtype=jnp.float32):
    """nn.Linear-style init. Weights stored [in, out] in `dtype`; biases kept f32.
    If production input_dim/hidden_dim aren't multiples of 128, zero-padding the weight
    matrices here (one-time) removes ragged-lane MXU passes in every kernel call."""
    ks = jax.random.split(key, 6)

    def lin(kw, kb, fan_in, fan_out):
        bound = float(fan_in) ** -0.5
        w = jax.random.uniform(kw, (fan_in, fan_out), jnp.float32, -bound, bound).astype(dtype)
        b = jax.random.uniform(kb, (1, fan_out), jnp.float32, -bound, bound)
        return w, b

    w1, b1 = lin(ks[0], ks[1], input_dim, hidden_dim)
    w2, b2 = lin(ks[2], ks[3], hidden_dim, hidden_dim)
    w3, b3 = lin(ks[4], ks[5], hidden_dim, 1)
    return {"w1": w1, "b1": b1, "w2": w2, "b2": b2, "w3": w3, "b3": b3}


def reference_forward(x, p):
    f32 = jnp.float32
    h1 = jnp.maximum(x.astype(f32) @ p["w1"].astype(f32) + p["b1"], 0.0)
    h2 = jnp.maximum(h1 @ p["w2"].astype(f32) + p["b2"], 0.0)
    return h2 @ p["w3"].astype(f32) + p["b3"]


if __name__ == "__main__":
    key = jax.random.PRNGKey(0)
    k_params, k_x = jax.random.split(key)

    batch, input_dim, hidden_dim = 8, 16, 32
    x = jax.random.normal(k_x, (batch, input_dim), dtype=jnp.float32)

    # 1) f32 path, single block covering the whole (tiny) batch.
    params = init_params(k_params, input_dim, hidden_dim, dtype=jnp.float32)
    out = jax.block_until_ready(accuracy_predictor_forward(x, params))
    ref = reference_forward(x, params)
    assert out.shape == (batch, 1), out.shape
    assert jnp.allclose(out, ref, atol=1e-4, rtol=1e-4), (out, ref)

    # 2) f32 path, multi-tile grid with a partial final block (no jnp.pad of x).
    batch2 = 300
    x2 = jax.random.normal(jax.random.PRNGKey(1), (batch2, input_dim), dtype=jnp.float32)
    ref2 = reference_forward(x2, params)
    out2a = jax.block_until_ready(accuracy_predictor_forward(x2, params))          # heuristic tile
    out2b = jax.block_until_ready(accuracy_predictor_forward(x2, params, tile_b=128))
    assert out2a.shape == (batch2, 1) and out2b.shape == (batch2, 1)
    assert jnp.allclose(out2a, ref2, atol=1e-4, rtol=1e-4), (out2a, ref2)
    assert jnp.allclose(out2b, ref2, atol=1e-4, rtol=1e-4), (out2b, ref2)

    # 3) bf16 weights/activations (x stays f32 in HBM, cast in-kernel; f32 accumulation).
    params_bf16 = init_params(k_params, input_dim, hidden_dim, dtype=jnp.bfloat16)
    out3 = jax.block_until_ready(accuracy_predictor_forward(x, params_bf16))
    ref3 = reference_forward(x, params_bf16)
    assert out3.shape == (batch, 1), out3.shape
    assert jnp.allclose(out3, ref3, atol=5e-2, rtol=5e-2), (out3, ref3)

    print("KERNEL_OK")
</pallas_src>

<mosaic_0001>
module attributes {stable_mosaic.version = 11 : i64} {
  func.func @_mlp_kernel(%arg0: i32, %arg1: memref<8x16xf32, #tpu.memory_space<vmem>>, %arg2: memref<16x32xf32, #tpu.memory_space<vmem>>, %arg3: memref<1x32xf32, #tpu.memory_space<vmem>>, %arg4: memref<32x32xf32, #tpu.memory_space<vmem>>, %arg5: memref<1x32xf32, #tpu.memory_space<vmem>>, %arg6: memref<1x32xf32, #tpu.memory_space<vmem>>, %arg7: memref<1x1xf32, #tpu.memory_space<smem>>, %arg8: memref<1x8xf32, #tpu.memory_space<vmem>>) attributes {dimension_semantics = [#tpu.dimension_semantics<parallel>], iteration_bounds = array<i64: 1>, scalar_prefetch = 0 : i64, scratch_operands = 0 : i64, tpu.core_type = #tpu.core_type<tc>, window_params = [{transform_indices = @transform_0, window_bounds = array<i64: 8, 16>}, {pipeline_mode = #tpu.pipeline_mode<synchronous>, transform_indices = @transform_1, window_bounds = array<i64: 16, 32>}, {pipeline_mode = #tpu.pipeline_mode<synchronous>, transform_indices = @transform_2, window_bounds = array<i64: 1, 32>}, {pipeline_mode = #tpu.pipeline_mode<synchronous>, transform_indices = @transform_3, window_bounds = array<i64: 32, 32>}, {pipeline_mode = #tpu.pipeline_mode<synchronous>, transform_indices = @transform_4, window_bounds = array<i64: 1, 32>}, {pipeline_mode = #tpu.pipeline_mode<synchronous>, transform_indices = @transform_5, window_bounds = array<i64: 1, 32>}, {transform_indices = @transform_6, window_bounds = array<i64: 1, 1>}, {transform_indices = @transform_7, window_bounds = array<i64: 1, 8>}]} {
    %c0 = arith.constant 0 : index
    %c0_0 = arith.constant 0 : index
    %0 = vector.load %arg1[%c0, %c0_0] : memref<8x16xf32, #tpu.memory_space<vmem>>, vector<8x16xf32>
    %c0_1 = arith.constant 0 : index
    %c0_2 = arith.constant 0 : index
    %1 = vector.load %arg2[%c0_1, %c0_2] : memref<16x32xf32, #tpu.memory_space<vmem>>, vector<16x32xf32>
    %cst = arith.constant dense<0.000000e+00> : vector<8x32xf32>
    %2 = tpu.matmul %0, %1, %cst {dimension_numbers = #tpu.dot_dimension_numbers<[1], [0], [0], [1], [0, 0, 1, 1], [], []>} : vector<8x16xf32>, vector<16x32xf32>, vector<8x32xf32> -> vector<8x32xf32>
    %c0_3 = arith.constant 0 : index
    %c0_4 = arith.constant 0 : index
    %3 = vector.load %arg3[%c0_3, %c0_4] : memref<1x32xf32, #tpu.memory_space<vmem>>, vector<1x32xf32>
    %4 = vector.broadcast %3 : vector<1x32xf32> to vector<8x32xf32>
    %5 = arith.addf %2, %4 : vector<8x32xf32>
    %cst_5 = arith.constant 0.000000e+00 : f32
    %6 = vector.broadcast %cst_5 : f32 to vector<8x32xf32>
    %7 = arith.maximumf %5, %6 : vector<8x32xf32>
    %c0_6 = arith.constant 0 : index
    %c0_7 = arith.constant 0 : index
    %8 = vector.load %arg4[%c0_6, %c0_7] : memref<32x32xf32, #tpu.memory_space<vmem>>, vector<32x32xf32>
    %cst_8 = arith.constant dense<0.000000e+00> : vector<8x32xf32>
    %9 = tpu.matmul %7, %8, %cst_8 {dimension_numbers = #tpu.dot_dimension_numbers<[1], [0], [0], [1], [0, 0, 1, 1], [], []>} : vector<8x32xf32>, vector<32x32xf32>, vector<8x32xf32> -> vector<8x32xf32>
    %c0_9 = arith.constant 0 : index
    %c0_10 = arith.constant 0 : index
    %10 = vector.load %arg5[%c0_9, %c0_10] : memref<1x32xf32, #tpu.memory_space<vmem>>, vector<1x32xf32>
    %11 = vector.broadcast %10 : vector<1x32xf32> to vector<8x32xf32>
    %12 = arith.addf %9, %11 : vector<8x32xf32>
    %cst_11 = arith.constant 0.000000e+00 : f32
    %13 = vector.broadcast %cst_11 : f32 to vector<8x32xf32>
    %14 = arith.maximumf %12, %13 : vector<8x32xf32>
    %c0_12 = arith.constant 0 : index
    %c0_13 = arith.constant 0 : index
    %15 = vector.load %arg6[%c0_12, %c0_13] : memref<1x32xf32, #tpu.memory_space<vmem>>, vector<1x32xf32>
    %cst_14 = arith.constant dense<0.000000e+00> : vector<1x8xf32>
    %16 = tpu.matmul %15, %14, %cst_14 {dimension_numbers = #tpu.dot_dimension_numbers<[1], [1], [0], [0], [0, 0, 1, 0], [], []>} : vector<1x32xf32>, vector<8x32xf32>, vector<1x8xf32> -> vector<1x8xf32>
    %c0_15 = arith.constant 0 : index
    %c0_16 = arith.constant 0 : index
    %17 = memref.load %arg7[%c0_15, %c0_16] : memref<1x1xf32, #tpu.memory_space<smem>>
    %18 = vector.broadcast %17 : f32 to vector<1x8xf32>
    %19 = arith.addf %16, %18 : vector<1x8xf32>
    %c0_17 = arith.constant 0 : index
    %c0_18 = arith.constant 0 : index
    %20 = vector.load %arg8[%c0_17, %c0_18] : memref<1x8xf32, #tpu.memory_space<vmem>>, vector<1x8xf32>
    tpu.vector_store %arg8[%c0_17, %c0_18], %19 {strides = array<i32>} : memref<1x8xf32, #tpu.memory_space<vmem>>, vector<1x8xf32>,
    return
  }
  func.func @transform_0(%arg0: i32) -> (i32, i32) {
    %c0_i32 = arith.constant 0 : i32
    %c0_i32_0 = arith.constant 0 : i32
    return %arg0, %c0_i32 : i32, i32
  }
  func.func @transform_1(%arg0: i32) -> (i32, i32) {
    %c0_i32 = arith.constant 0 : i32
    %c0_i32_0 = arith.constant 0 : i32
    %c0_i32_1 = arith.constant 0 : i32
    return %c0_i32, %c0_i32_0 : i32, i32
  }
  func.func @transform_2(%arg0: i32) -> (i32, i32) {
    %c0_i32 = arith.constant 0 : i32
    %c0_i32_0 = arith.constant 0 : i32
    %c0_i32_1 = arith.constant 0 : i32
    return %c0_i32, %c0_i32_0 : i32, i32
  }
  func.func @transform_3(%arg0: i32) -> (i32, i32) {
    %c0_i32 = arith.constant 0 : i32
    %c0_i32_0 = arith.constant 0 : i32
    %c0_i32_1 = arith.constant 0 : i32
    return %c0_i32, %c0_i32_0 : i32, i32
  }
  func.func @transform_4(%arg0: i32) -> (i32, i32) {
    %c0_i32 = arith.constant 0 : i32
    %c0_i32_0 = arith.constant 0 : i32
    %c0_i32_1 = arith.constant 0 : i32
    return %c0_i32, %c0_i32_0 : i32, i32
  }
  func.func @transform_5(%arg0: i32) -> (i32, i32) {
    %c0_i32 = arith.constant 0 : i32
    %c0_i32_0 = arith.constant 0 : i32
    %c0_i32_1 = arith.constant 0 : i32
    return %c0_i32, %c0_i32_0 : i32, i32
  }
  func.func @transform_6(%arg0: i32) -> (i32, i32) {
    %c0_i32 = arith.constant 0 : i32
    %c0_i32_0 = arith.constant 0 : i32
    %c0_i32_1 = arith.constant 0 : i32
    return %c0_i32, %c0_i32_0 : i32, i32
  }
  func.func @transform_7(%arg0: i32) -> (i32, i32) {
    %c0_i32 = arith.constant 0 : i32
    %c0_i32_0 = arith.constant 0 : i32
    return %c0_i32, %arg0 : i32, i32
  }
}

</mosaic_0001>

<llo_original>
// kernel: tpu_custom_call.1
$region0: #{tpu_custom_call.1}
  #allocation0 [shape = 'u32[]', space=smem, size = 0x4, offset = 0x4, fixed_abs, tag = 'smem constant byte address 0x4 - core index']
  #allocation1 [shape = 'u32[72,128]{1,0:T(1,128)}', space=vmem, size = 0x9000, scoped, tag = 'internal scratch']
  #allocation2 [shape = 'f32[1,1]{1,0:T(1,128)S(6)}', space=smem, size = 0x200, scoped, tag = 'scoped memory for tpu_custom_call.1']
  %s0 = inlined_call_operand.hbm [shape: f32[8,16], index: 0, kind: input, shape index: {}]
  %s1 = inlined_call_operand.hbm [shape: f32[16,32], index: 1, kind: input, shape index: {}]
  %s2 = inlined_call_operand.vmem [shape: f32[1,32], index: 2, kind: input, shape index: {}]
  %s3 = inlined_call_operand.hbm [shape: f32[32,32], index: 3, kind: input, shape index: {}]
  %s4 = inlined_call_operand.vmem [shape: f32[1,32], index: 4, kind: input, shape index: {}]
  %s5 = inlined_call_operand.vmem [shape: f32[1,32], index: 5, kind: input, shape index: {}]
  %s6 = inlined_call_operand.<no memory space> [shape: f32[1,1], index: 6, kind: input, shape index: {}]
  %s7 = inlined_call_operand.hbm [shape: f32[1,8], index: 7, kind: output, shape index: {}]
  %s8 = sld [smem:[#allocation0]]
  $region50: #{tpu_custom_call.1} parent=0
    _
  %s10 = ssub.s32 1, %s8
  %s11 = scalar_select 0, %s10, %s8
  %12 = sst [smem:[#allocation2]] %s6
  $region1: #{tpu_custom_call.1} parent=0
    #allocation3 [shape = 'u8[4096]{0}', space=vmem, size = 0x1000, scoped, tag = 'input window, operand 0, single buffered']
    #allocation4 [shape = 's32[1]{0}', space=sflag, size = 0x4, scoped, tag = 'scoped memory for tpu_custom_call.1']
    #allocation5 [shape = 's32[1]{0}', space=sflag, size = 0x4, scoped, tag = 'scoped memory for tpu_custom_call.1']
    #allocation6 [shape = 'u8[8192]{0}', space=vmem, size = 0x2000, scoped, tag = 'input window, operand 1, single buffered']
    #allocation7 [shape = 's32[1]{0}', space=sflag, size = 0x4, scoped, tag = 'scoped memory for tpu_custom_call.1']
    #allocation8 [shape = 'u8[16384]{0}', space=vmem, size = 0x4000, scoped, tag = 'input window, operand 3, single buffered']
    #allocation9 [shape = 'u8[512]{0}', space=vmem, size = 0x400, scoped, tag = 'output window, operand 0, single buffered']
    %13 = vsyncpa [#allocation4], 0
    %14 = vsyncpa [#allocation7], 0
    %15 = vsyncpa [#allocation5], 0
    // Predicated region
    $region2: #{tpu_custom_call.1} parent=1 // pred_check
      _
    $region3: #{tpu_custom_call.1} parent=1 // pred_check_branch
      %17 = sbr.rel (0) target = $region5
    $region4: #{tpu_custom_call.1} parent=1 // pred_region
      %19 = vsyncadd [#allocation4], 0
      %s21 = sshll.u32 %s0, 4
      %s22 = int_to_ptr.hbm [resolvable:$true] %s21
      %s23 = sshll.u32 [#allocation3], 4
      %s24 = int_to_ptr.vmem [resolvable:$true] %s23
      %26 = dma.hbm_to_vmem [thread:$0]  %s22, 128, %s24, [#allocation4]
    $region5: #{tpu_custom_call.1} parent=1 // pred_fallthru
      _
    // Predicated region
    $region6: #{tpu_custom_call.1} parent=1 // pred_check
      _
    $region7: #{tpu_custom_call.1} parent=1 // pred_check_branch
      %28 = sbr.rel (0) target = $region9
    $region8: #{tpu_custom_call.1} parent=1 // pred_region
      %30 = vsyncadd [#allocation7], 0
      %s31 = sshll.u32 %s1, 4
      %s32 = int_to_ptr.hbm [resolvable:$true] %s31
      %s33 = sshll.u32 [#allocation6], 4
      %s34 = int_to_ptr.vmem [resolvable:$true] %s33
      %39 = dma.hbm_to_vmem [thread:$0]  %s32, 256, %s34, [#allocation7], 128, 128, 8
    $region9: #{tpu_custom_call.1} parent=1 // pred_fallthru
      _
    // Predicated region
    $region10: #{tpu_custom_call.1} parent=1 // pred_check
      _
    $region11: #{tpu_custom_call.1} parent=1 // pred_check_branch
      %41 = sbr.rel (0) target = $region13
    $region12: #{tpu_custom_call.1} parent=1 // pred_region
      _
    $region13: #{tpu_custom_call.1} parent=1 // pred_fallthru
      _
    // Predicated region
    $region14: #{tpu_custom_call.1} parent=1 // pred_check
      _
    $region15: #{tpu_custom_call.1} parent=1 // pred_check_branch
      %43 = sbr.rel (0) target = $region17
    $region16: #{tpu_custom_call.1} parent=1 // pred_region
      %45 = vsyncadd [#allocation7], 0
      %s46 = sshll.u32 %s3, 4
      %s47 = int_to_ptr.hbm [resolvable:$true] %s46
      %s48 = sshll.u32 [#allocation8], 4
      %s49 = int_to_ptr.vmem [resolvable:$true] %s48
      %54 = dma.hbm_to_vmem [thread:$0]  %s47, 512, %s49, [#allocation7], 128, 128, 8
    $region17: #{tpu_custom_call.1} parent=1 // pred_fallthru
      _
    // Predicated region
    $region18: #{tpu_custom_call.1} parent=1 // pred_check
      _
    $region19: #{tpu_custom_call.1} parent=1 // pred_check_branch
      %56 = sbr.rel (0) target = $region21
    $region20: #{tpu_custom_call.1} parent=1 // pred_region
      _
    $region21: #{tpu_custom_call.1} parent=1 // pred_fallthru
      _
    // Predicated region
    $region22: #{tpu_custom_call.1} parent=1 // pred_check
      _
    $region23: #{tpu_custom_call.1} parent=1 // pred_check_branch
      %58 = sbr.rel (0) target = $region25
    $region24: #{tpu_custom_call.1} parent=1 // pred_region
      _
    $region25: #{tpu_custom_call.1} parent=1 // pred_fallthru
      _
    // Predicated region
    $region26: #{tpu_custom_call.1} parent=1 // pred_check
      _
    $region27: #{tpu_custom_call.1} parent=1 // pred_check_branch
      %60 = sbr.rel (0) target = $region29
    $region28: #{tpu_custom_call.1} parent=1 // pred_region
      _
    $region29: #{tpu_custom_call.1} parent=1 // pred_fallthru
      _
    // Predicated region
    $region30: #{tpu_custom_call.1} parent=1 // pred_check
      _
    $region31: #{tpu_custom_call.1} parent=1 // pred_check_branch
      %62 = sbr.rel (0) target = $region33
    $region32: #{tpu_custom_call.1} parent=1 // pred_region
      %64 = dma.done [#allocation4], 128
    $region33: #{tpu_custom_call.1} parent=1 // pred_fallthru
      _
    // Predicated region
    $region34: #{tpu_custom_call.1} parent=1 // pred_check
      _
    $region35: #{tpu_custom_call.1} parent=1 // pred_check_branch
      %66 = sbr.rel (0) target = $region37
    $region36: #{tpu_custom_call.1} parent=1 // pred_region
      %68 = dma.done [#allocation7], 256
    $region37: #{tpu_custom_call.1} parent=1 // pred_fallthru
      _
    // Predicated region
    $region38: #{tpu_custom_call.1} parent=1 // pred_check
      _
    $region39: #{tpu_custom_call.1} parent=1 // pred_check_branch
      %70 = sbr.rel (0) target = $region41
    $region40: #{tpu_custom_call.1} parent=1 // pred_region
      %72 = dma.done [#allocation7], 512
    $region41: #{tpu_custom_call.1} parent=1 // pred_fallthru
      _
    %v73 = vld [vmem:[#allocation3] sm:$0xff]
    %v74 = vld [vmem:[#allocation6] sm:$0xff]
    %v75 = vld [vmem:[#allocation6 + $0x8] sm:$0xff]
    %v76 = vld [vmem:[%s2] sm:$0x1]
    %v78 = vperm.slane %v76, 0
    %vm80 = vcmask 130048
    %v82 = vsel %vm80, %v73, 0
    %84 = vmatpush.msra.mxu0 0.0
    %85 = vmatpush.msra.mxu0 0.0
    %86 = vmatpush.msra.mxu0 0.0
    %87 = vmatpush.msra.mxu0 0.0
    %88 = vmatpush.msra.mxu0 0.0
    %89 = vmatpush.msra.mxu0 0.0
    %90 = vmatpush.msra.mxu0 0.0
    %91 = vmatpush.msra.mxu0 0.0
    %92 = vmatpush.msra.mxu0 0.0
    %93 = vmatpush.msra.mxu0 0.0
    %94 = vmatpush.msra.mxu0 0.0
    %95 = vmatpush.msra.mxu0 0.0
    %96 = vmatpush.msra.mxu0 0.0
    %97 = vmatpush.msra.mxu0 0.0
    %98 = vmatpush.msra.mxu0 %v75
    %99 = vmatpush.msra.mxu0 %v74
    %100 = vmatmul.f32.gmra.mxu0 %v82
    %v101 = vpop.f32.mrf.mxu0
    %v102 = vadd.f32 %v78, %v101
    %103 = vdwg.mxu0
    %v104 = vmax.f32 %v102, 0.0
    %v105 = vld [vmem:[#allocation8] sm:$0xff]
    %v106 = vld [vmem:[#allocation8 + $0x8] sm:$0xff]
    %v107 = vld [vmem:[#allocation8 + $0x10] sm:$0xff]
    %v108 = vld [vmem:[#allocation8 + $0x18] sm:$0xff]
    %v109 = vld [vmem:[%s4] sm:$0x1]
    %v111 = vperm.slane %v109, 0
    %vm113 = vcmask 261120
    %v115 = vsel %vm113, %v104, 0
    %117 = vmatpush.msra.mxu0 0.0
    %118 = vmatpush.msra.mxu0 0.0
    %119 = vmatpush.msra.mxu0 0.0
    %120 = vmatpush.msra.mxu0 0.0
    %121 = vmatpush.msra.mxu0 0.0
    %122 = vmatpush.msra.mxu0 0.0
    %123 = vmatpush.msra.mxu0 0.0
    %124 = vmatpush.msra.mxu0 0.0
    %125 = vmatpush.msra.mxu0 0.0
    %126 = vmatpush.msra.mxu0 0.0
    %127 = vmatpush.msra.mxu0 0.0
    %128 = vmatpush.msra.mxu0 0.0
    %129 = vmatpush.msra.mxu0 %v108
    %130 = vmatpush.msra.mxu0 %v107
    %131 = vmatpush.msra.mxu0 %v106
    %132 = vmatpush.msra.mxu0 %v105
    %133 = vmatmul.f32.gmra.mxu0 %v115
    %v134 = vpop.f32.mrf.mxu0
    %v135 = vadd.f32 %v111, %v134
    %136 = vdwg.mxu0
    %v137 = vmax.f32 %v135, 0.0
    %v138 = vld [vmem:[%s5] sm:$0x1]
    %s139 = sld [smem:[#allocation2]]
    %v140 = vstv %s139
    %v142 = vsel %vm113, %v138, 0
    %v145 = vsel %vm113, %v137, 0
    %147 = vmatpush.xpose.msra.mxu0 0.0
    %148 = vmatpush.xpose.msra.mxu0 0.0
    %149 = vmatpush.xpose.msra.mxu0 0.0
    %150 = vmatpush.xpose.msra.mxu0 0.0
    %151 = vmatpush.xpose.msra.mxu0 0.0
    %152 = vmatpush.xpose.msra.mxu0 0.0
    %153 = vmatpush.xpose.msra.mxu0 0.0
    %154 = vmatpush.xpose.msra.mxu0 0.0
    %155 = vmatpush.xpose.msra.mxu0 0.0
    %156 = vmatpush.xpose.msra.mxu0 0.0
    %157 = vmatpush.xpose.msra.mxu0 0.0
    %158 = vmatpush.xpose.msra.mxu0 0.0
    %159 = vmatpush.xpose.msra.mxu0 0.0
    %160 = vmatpush.xpose.msra.mxu0 0.0
    %161 = vmatpush.xpose.msra.mxu0 0.0
    %162 = vmatpush.xpose.msra.mxu0 %v145
    %163 = vmatmul.f32.gmra.mxu0 %v142
    %v164 = vpop.f32.mrf.mxu0
    %v165 = vadd.f32 %v140, %v164
    %166 = vdwg.mxu0
    %vm167 = vcmask 57344
    %168 = vst.msk [vmem:[#allocation9] sm:$0x1] %vm167, %v165
    // Predicated region
    $region42: #{tpu_custom_call.1} parent=1 // pred_check
      _
    $region43: #{tpu_custom_call.1} parent=1 // pred_check_branch
      %170 = sbr.rel (0) target = $region45
    $region44: #{tpu_custom_call.1} parent=1 // pred_region
      %172 = vsyncadd [#allocation5], 0
      %s174 = sshll.u32 [#allocation9], 4
      %s175 = int_to_ptr.vmem [resolvable:$true] %s174
      %s176 = sshll.u32 %s7, 4
      %s177 = int_to_ptr.hbm [resolvable:$true] %s176
      %179 = dma.vmem_to_hbm [thread:$0]  %s175, 16, %s177, [#allocation5]
    $region45: #{tpu_custom_call.1} parent=1 // pred_fallthru
      _
    // Predicated region
    $region46: #{tpu_custom_call.1} parent=1 // pred_check
      _
    $region47: #{tpu_custom_call.1} parent=1 // pred_check_branch
      %181 = sbr.rel (0) target = $region49
    $region48: #{tpu_custom_call.1} parent=1 // pred_region
      %183 = dma.done [#allocation5], 16
    $region49: #{tpu_custom_call.1} parent=1 // pred_fallthru
      _
    %184 = vsyncpa [#allocation4], 1
    %185 = vsyncpa [#allocation7], 1
    %186 = vsyncpa [#allocation5], 1

</llo_original>
